<compile_context>
chip_gen: v6e
topology: v6e:2x2x1
jax: 0.10.0
libtpu: 0.0.40
codegen_flags: <defaults>
</compile_context>

<pallas_src>
import functools
import math

import jax
import jax.numpy as jnp
from jax.experimental import pallas as pl
from jax.experimental.pallas import tpu as pltpu

_LANE = 128


def _round_up(a, b):
    return -(-a // b) * b


def _fmix32(x):
    """murmur3 finalizer: uint32 -> well-mixed uint32 (pure VPU int ops)."""
    x = x ^ (x >> 16)
    x = x * jnp.uint32(0x85EBCA6B)
    x = x ^ (x >> 13)
    x = x * jnp.uint32(0xC2B2AE35)
    x = x ^ (x >> 16)
    return x


def _bits_to_open_unit(bits):
    """uint32 random bits -> float32 uniform in (0, 1]."""
    mant = (bits >> 9) | jnp.uint32(0x3F800000)          # float in [1, 2)
    f = jax.lax.bitcast_convert_type(mant, jnp.float32)
    return jnp.float32(2.0) - f                          # (0, 1] -> safe for log


def _diffusion_kernel(x_ref, o_ref, *, sf, seed, block_rows):
    half = block_rows // 2
    pid = pl.program_id(0)

    # Global per-element counter for the TOP half of this block.  Each counter
    # yields TWO random words (streams 2*cnt and 2*cnt+1) -> one Box-Muller pair,
    # which supplies noise for one top-half element and one bottom-half element.
    row = jax.lax.broadcasted_iota(jnp.int32, (half, _LANE), 0)
    col = jax.lax.broadcasted_iota(jnp.int32, (half, _LANE), 1)
    cnt = ((pid * block_rows + row) * _LANE + col).astype(jnp.uint32)

    key = jnp.uint32((seed * 0x9E3779B9 + 0x7F4A7C15) & 0xFFFFFFFF)
    c2 = cnt * jnp.uint32(2)
    u1 = _bits_to_open_unit(_fmix32(c2 ^ key))
    u2 = _bits_to_open_unit(_fmix32((c2 + jnp.uint32(1)) ^ key))

    # Box-Muller: use BOTH outputs (cos and sin) -> half the EUP/PRNG work.
    r = jnp.sqrt(jnp.float32(-2.0) * jnp.log(u1))
    theta = jnp.float32(2.0 * math.pi) * u2
    z_top = r * jnp.cos(theta)
    z_bot = r * jnp.sin(theta)

    a = jnp.float32(1.0 - sf)
    b = jnp.float32(sf)

    x_top = x_ref[0:half, :].astype(jnp.float32)
    x_bot = x_ref[half:block_rows, :].astype(jnp.float32)
    o_ref[0:half, :] = (a * x_top + b * z_top).astype(o_ref.dtype)
    o_ref[half:block_rows, :] = (a * x_bot + b * z_bot).astype(o_ref.dtype)


def gaussian_diffusion_trainer(x_0, scale_factor, seed=0):
    """x_t = (1 - sf) * x_0 + sf * randn_like(x_0), computed in a Pallas TPU kernel."""
    orig_shape = x_0.shape
    orig_dtype = x_0.dtype
    total = x_0.size

    itemsize = jnp.dtype(orig_dtype).itemsize
    # Sub-32-bit dtypes pack along sublanes: keep block rows a multiple of the
    # packed sublane count, and even (so the Box-Muller halves tile cleanly).
    min_rows = {4: 8, 2: 16, 1: 32}.get(itemsize, 8)
    unit = 2 * min_rows
    # ~1 MiB per block regardless of dtype (2048 rows for f32, 4096 for bf16, ...).
    target_rows = max(unit, (1 << 20) // (_LANE * itemsize))

    rows_needed = _round_up(total, _LANE) // _LANE
    block_rows = min(target_rows, _round_up(rows_needed, unit))
    rows = _round_up(rows_needed, block_rows)
    grid = (rows // block_rows,)

    flat = jnp.reshape(x_0, (-1,))
    pad = rows * _LANE - total
    if pad:  # tail-only pad; skipped entirely when already block-aligned
        flat = jnp.pad(flat, (0, pad))
    x2d = flat.reshape(rows, _LANE)

    kernel = functools.partial(
        _diffusion_kernel,
        sf=float(scale_factor),
        seed=int(seed),
        block_rows=block_rows,
    )

    out2d = pl.pallas_call(
        kernel,
        out_shape=jax.ShapeDtypeStruct((rows, _LANE), orig_dtype),
        grid=grid,
        in_specs=[pl.BlockSpec((block_rows, _LANE), lambda i: (i, 0))],
        out_specs=pl.BlockSpec((block_rows, _LANE), lambda i: (i, 0)),
        compiler_params=pltpu.CompilerParams(
            # Grid iterations are fully independent -> shard across TCs on v7x.
            dimension_semantics=("parallel",),
        ),
    )(x2d)

    out = out2d.reshape(-1)
    if pad:
        out = out[:total]
    return out.reshape(orig_shape)


if __name__ == "__main__":
    key = jax.random.PRNGKey(0)
    # Matches the PyTorch module usage: x_0 is an NCHW image batch.
    x_0 = jax.random.normal(key, (2, 4, 16, 16), dtype=jnp.float32)
    scale_factor = 0.3  # the module's constructor argument

    x_t = gaussian_diffusion_trainer(x_0, scale_factor, seed=42)
    x_t = jax.block_until_ready(x_t)

    assert x_t.shape == x_0.shape and x_t.dtype == x_0.dtype

    # Sanity check: (x_t - (1 - sf) * x_0) / sf should be ~N(0, 1) noise.
    resid = (x_t - (1.0 - scale_factor) * x_0) / scale_factor
    mean = float(jnp.mean(resid))
    std = float(jnp.std(resid))
    assert abs(mean) < 0.15, f"noise mean off: {mean}"
    assert abs(std - 1.0) < 0.15, f"noise std off: {std}"

    print("KERNEL_OK")
</pallas_src>

<mosaic_0001>
module attributes {stable_mosaic.version = 11 : i64} {
  func.func @_diffusion_kernel(%arg0: i32, %arg1: memref<16x128xf32, #tpu.memory_space<vmem>>, %arg2: memref<16x128xf32, #tpu.memory_space<vmem>>) attributes {dimension_semantics = [#tpu.dimension_semantics<parallel>], iteration_bounds = array<i64: 1>, scalar_prefetch = 0 : i64, scratch_operands = 0 : i64, tpu.core_type = #tpu.core_type<tc>, window_params = [{transform_indices = @transform_0, window_bounds = array<i64: 16, 128>}, {transform_indices = @transform_1, window_bounds = array<i64: 16, 128>}]} {
    %0 = tpu.iota {dimensions = array<i32: 0>} : vector<8x128xi32>
    %1 = tpu.iota {dimensions = array<i32: 1>} : vector<8x128xi32>
    %c16_i32 = arith.constant 16 : i32
    %2 = arith.muli %arg0, %c16_i32 : i32
    %3 = vector.broadcast %2 : i32 to vector<8x128xi32>
    %4 = arith.addi %3, %0 : vector<8x128xi32>
    %c128_i32 = arith.constant 128 : i32
    %5 = vector.broadcast %c128_i32 : i32 to vector<8x128xi32>
    %6 = arith.muli %4, %5 : vector<8x128xi32>
    %7 = arith.addi %6, %1 : vector<8x128xi32>
    %c2_i32 = arith.constant 2 : i32
    %8 = vector.broadcast %c2_i32 : i32 to vector<8x128xi32>
    %9 = arith.muli %7, %8 : vector<8x128xi32>
    %c1952740463_i32 = arith.constant 1952740463 : i32
    %10 = vector.broadcast %c1952740463_i32 : i32 to vector<8x128xi32>
    %11 = arith.xori %9, %10 : vector<8x128xi32>
    %c16_i32_0 = arith.constant 16 : i32
    %12 = vector.broadcast %c16_i32_0 : i32 to vector<8x128xi32>
    %13 = arith.shrui %11, %12 : vector<8x128xi32>
    %14 = arith.xori %11, %13 : vector<8x128xi32>
    %c-2048144789_i32 = arith.constant -2048144789 : i32
    %15 = vector.broadcast %c-2048144789_i32 : i32 to vector<8x128xi32>
    %16 = arith.muli %14, %15 : vector<8x128xi32>
    %c13_i32 = arith.constant 13 : i32
    %17 = vector.broadcast %c13_i32 : i32 to vector<8x128xi32>
    %18 = arith.shrui %16, %17 : vector<8x128xi32>
    %19 = arith.xori %16, %18 : vector<8x128xi32>
    %c-1028477387_i32 = arith.constant -1028477387 : i32
    %20 = vector.broadcast %c-1028477387_i32 : i32 to vector<8x128xi32>
    %21 = arith.muli %19, %20 : vector<8x128xi32>
    %c16_i32_1 = arith.constant 16 : i32
    %22 = vector.broadcast %c16_i32_1 : i32 to vector<8x128xi32>
    %23 = arith.shrui %21, %22 : vector<8x128xi32>
    %24 = arith.xori %21, %23 : vector<8x128xi32>
    %c9_i32 = arith.constant 9 : i32
    %25 = vector.broadcast %c9_i32 : i32 to vector<8x128xi32>
    %26 = arith.shrui %24, %25 : vector<8x128xi32>
    %c1065353216_i32 = arith.constant 1065353216 : i32
    %27 = vector.broadcast %c1065353216_i32 : i32 to vector<8x128xi32>
    %28 = arith.ori %26, %27 : vector<8x128xi32>
    %29 = tpu.bitcast %28 : vector<8x128xi32> -> vector<8x128xf32>
    %cst = arith.constant 2.000000e+00 : f32
    %30 = vector.broadcast %cst : f32 to vector<8x128xf32>
    %31 = arith.subf %30, %29 : vector<8x128xf32>
    %c1_i32 = arith.constant 1 : i32
    %32 = vector.broadcast %c1_i32 : i32 to vector<8x128xi32>
    %33 = arith.addi %9, %32 : vector<8x128xi32>
    %c1952740463_i32_2 = arith.constant 1952740463 : i32
    %34 = vector.broadcast %c1952740463_i32_2 : i32 to vector<8x128xi32>
    %35 = arith.xori %33, %34 : vector<8x128xi32>
    %c16_i32_3 = arith.constant 16 : i32
    %36 = vector.broadcast %c16_i32_3 : i32 to vector<8x128xi32>
    %37 = arith.shrui %35, %36 : vector<8x128xi32>
    %38 = arith.xori %35, %37 : vector<8x128xi32>
    %c-2048144789_i32_4 = arith.constant -2048144789 : i32
    %39 = vector.broadcast %c-2048144789_i32_4 : i32 to vector<8x128xi32>
    %40 = arith.muli %38, %39 : vector<8x128xi32>
    %c13_i32_5 = arith.constant 13 : i32
    %41 = vector.broadcast %c13_i32_5 : i32 to vector<8x128xi32>
    %42 = arith.shrui %40, %41 : vector<8x128xi32>
    %43 = arith.xori %40, %42 : vector<8x128xi32>
    %c-1028477387_i32_6 = arith.constant -1028477387 : i32
    %44 = vector.broadcast %c-1028477387_i32_6 : i32 to vector<8x128xi32>
    %45 = arith.muli %43, %44 : vector<8x128xi32>
    %c16_i32_7 = arith.constant 16 : i32
    %46 = vector.broadcast %c16_i32_7 : i32 to vector<8x128xi32>
    %47 = arith.shrui %45, %46 : vector<8x128xi32>
    %48 = arith.xori %45, %47 : vector<8x128xi32>
    %c9_i32_8 = arith.constant 9 : i32
    %49 = vector.broadcast %c9_i32_8 : i32 to vector<8x128xi32>
    %50 = arith.shrui %48, %49 : vector<8x128xi32>
    %c1065353216_i32_9 = arith.constant 1065353216 : i32
    %51 = vector.broadcast %c1065353216_i32_9 : i32 to vector<8x128xi32>
    %52 = arith.ori %50, %51 : vector<8x128xi32>
    %53 = tpu.bitcast %52 : vector<8x128xi32> -> vector<8x128xf32>
    %cst_10 = arith.constant 2.000000e+00 : f32
    %54 = vector.broadcast %cst_10 : f32 to vector<8x128xf32>
    %55 = arith.subf %54, %53 : vector<8x128xf32>
    %56 = math.log %31 : vector<8x128xf32>
    %cst_11 = arith.constant -2.000000e+00 : f32
    %57 = vector.broadcast %cst_11 : f32 to vector<8x128xf32>
    %58 = arith.mulf %57, %56 : vector<8x128xf32>
    %59 = math.sqrt %58 : vector<8x128xf32>
    %cst_12 = arith.constant 6.28318548 : f32
    %60 = vector.broadcast %cst_12 : f32 to vector<8x128xf32>
    %61 = arith.mulf %60, %55 : vector<8x128xf32>
    %62 = math.cos %61 : vector<8x128xf32>
    %63 = arith.mulf %59, %62 : vector<8x128xf32>
    %64 = math.sin %61 : vector<8x128xf32>
    %65 = arith.mulf %59, %64 : vector<8x128xf32>
    %c0 = arith.constant 0 : index
    %c0_13 = arith.constant 0 : index
    %66 = vector.load %arg1[%c0, %c0_13] : memref<16x128xf32, #tpu.memory_space<vmem>>, vector<8x128xf32>
    %c8 = arith.constant 8 : index
    %c0_14 = arith.constant 0 : index
    %67 = vector.load %arg1[%c8, %c0_14] : memref<16x128xf32, #tpu.memory_space<vmem>>, vector<8x128xf32>
    %cst_15 = arith.constant 0.699999988 : f32
    %68 = vector.broadcast %cst_15 : f32 to vector<8x128xf32>
    %69 = arith.mulf %68, %66 : vector<8x128xf32>
    %cst_16 = arith.constant 3.000000e-01 : f32
    %70 = vector.broadcast %cst_16 : f32 to vector<8x128xf32>
    %71 = arith.mulf %70, %63 : vector<8x128xf32>
    %72 = arith.addf %69, %71 : vector<8x128xf32>
    %c0_17 = arith.constant 0 : index
    %c0_18 = arith.constant 0 : index
    %73 = vector.load %arg2[%c0_17, %c0_18] : memref<16x128xf32, #tpu.memory_space<vmem>>, vector<8x128xf32>
    tpu.vector_store %arg2[%c0_17, %c0_18], %72 {strides = array<i32>} : memref<16x128xf32, #tpu.memory_space<vmem>>, vector<8x128xf32>,
    %cst_19 = arith.constant 0.699999988 : f32
    %74 = vector.broadcast %cst_19 : f32 to vector<8x128xf32>
    %75 = arith.mulf %74, %67 : vector<8x128xf32>
    %cst_20 = arith.constant 3.000000e-01 : f32
    %76 = vector.broadcast %cst_20 : f32 to vector<8x128xf32>
    %77 = arith.mulf %76, %65 : vector<8x128xf32>
    %78 = arith.addf %75, %77 : vector<8x128xf32>
    %c8_21 = arith.constant 8 : index
    %c0_22 = arith.constant 0 : index
    %79 = vector.load %arg2[%c8_21, %c0_22] : memref<16x128xf32, #tpu.memory_space<vmem>>, vector<8x128xf32>
    tpu.vector_store %arg2[%c8_21, %c0_22], %78 {strides = array<i32>} : memref<16x128xf32, #tpu.memory_space<vmem>>, vector<8x128xf32>,
    return
  }
  func.func @transform_0(%arg0: i32) -> (i32, i32) {
    %c0_i32 = arith.constant 0 : i32
    %c0_i32_0 = arith.constant 0 : i32
    return %arg0, %c0_i32 : i32, i32
  }
  func.func @transform_1(%arg0: i32) -> (i32, i32) {
    %c0_i32 = arith.constant 0 : i32
    %c0_i32_0 = arith.constant 0 : i32
    return %arg0, %c0_i32 : i32, i32
  }
}

</mosaic_0001>

<llo_original>
// kernel: tpu_custom_call.1
$region0: #{tpu_custom_call.1}
  #allocation0 [shape = 'u32[]', space=smem, size = 0x4, offset = 0x4, fixed_abs, tag = 'smem constant byte address 0x4 - core index']
  #allocation1 [shape = 'u32[144,128]{1,0:T(1,128)}', space=vmem, size = 0x12000, scoped, tag = 'internal scratch']
  %s0 = inlined_call_operand.hbm [shape: f32[16,128], index: 0, kind: input, shape index: {}]
  %s1 = inlined_call_operand.hbm [shape: f32[16,128], index: 1, kind: output, shape index: {}]
  %s2 = sld [smem:[#allocation0]]
  $region18: #{tpu_custom_call.1} parent=0
    _
  %s4 = ssub.s32 1, %s2
  %s5 = scalar_select 0, %s4, %s2
  $region1: #{tpu_custom_call.1} parent=0
    #allocation2 [shape = 'u8[8192]{0}', space=vmem, size = 0x2000, scoped, tag = 'input window, operand 0, single buffered']
    #allocation3 [shape = 's32[1]{0}', space=sflag, size = 0x4, scoped, tag = 'scoped memory for tpu_custom_call.1']
    #allocation4 [shape = 's32[1]{0}', space=sflag, size = 0x4, scoped, tag = 'scoped memory for tpu_custom_call.1']
    #allocation5 [shape = 'u8[8192]{0}', space=vmem, size = 0x2000, scoped, tag = 'output window, operand 0, single buffered']
    %6 = vsyncpa [#allocation3], 0
    %7 = vsyncpa [#allocation4], 0
    // Predicated region
    $region2: #{tpu_custom_call.1} parent=1 // pred_check
      _
    $region3: #{tpu_custom_call.1} parent=1 // pred_check_branch
      %9 = sbr.rel (0) target = $region5
    $region4: #{tpu_custom_call.1} parent=1 // pred_region
      %s11 = ssub.s32 256, 256
      %12 = vsyncadd [#allocation3], %s11
      %s13 = sshll.u32 [#allocation2], 4
      %s14 = int_to_ptr.vmem [resolvable:$true] %s13
      %19 = dma.hbm_to_vmem [thread:$0]  %s0, 256, %s14, [#allocation3], 128, 128, 8
    $region5: #{tpu_custom_call.1} parent=1 // pred_fallthru
      _
    // Predicated region
    $region6: #{tpu_custom_call.1} parent=1 // pred_check
      _
    $region7: #{tpu_custom_call.1} parent=1 // pred_check_branch
      %21 = sbr.rel (0) target = $region9
    $region8: #{tpu_custom_call.1} parent=1 // pred_region
      %22 = dma.done [#allocation3], 256
    $region9: #{tpu_custom_call.1} parent=1 // pred_fallthru
      _
    %v23 = vlaneseq
    %v24 = vshrl.u32 %v23, 7
    %v25 = vlaneseq
    %v26 = vand.u32 %v25, 127
    %s27 = smul.u32 0, 16
    %v28 = vstv %s27
    %v29 = vadd.s32 %v28, %v24
    %v30 = vmul.u32 %v29, 128
    %v31 = vadd.s32 %v30, %v26
    %v32 = vmul.u32 %v31, 2
    %v33 = vxor.u32 %v32, 1952740463
    %v34 = vshrl.u32 %v33, 16
    %v35 = vxor.u32 %v33, %v34
    %v36 = vmul.u32 %v35, 2246822507
    %v37 = vshrl.u32 %v36, 13
    %v38 = vxor.u32 %v36, %v37
    %v39 = vmul.u32 %v38, 3266489909
    %v40 = vshrl.u32 %v39, 16
    %v41 = vxor.u32 %v39, %v40
    %v42 = vshrl.u32 %v41, 9
    %v43 = vor.u32 %v42, 1065353216
    %v45 = vsub.f32 2.0, %v43
    %v46 = vadd.s32 %v32, 1
    %v47 = vxor.u32 %v46, 1952740463
    %v48 = vshrl.u32 %v47, 16
    %v49 = vxor.u32 %v47, %v48
    %v50 = vmul.u32 %v49, 2246822507
    %v51 = vshrl.u32 %v50, 13
    %v52 = vxor.u32 %v50, %v51
    %v53 = vmul.u32 %v52, 3266489909
    %v54 = vshrl.u32 %v53, 16
    %v55 = vxor.u32 %v53, %v54
    %v56 = vshrl.u32 %v55, 9
    %v57 = vor.u32 %v56, 1065353216
    %v59 = vsub.f32 2.0, %v57
    %v60 = vlog2.pop %v45
    %v61 = vmul.f32 %v60, 0.6931472
    %v62 = vmul.f32 %v61, -2.0
    %v63 = vrsqrt.pop %v62
    %v64 = vmul.f32 %v62, %v63
    %vm65 = vcmp.eq.f32.partialorder %v62, inf
    %v66 = vsel %vm65, %v62, %v64
    %vm67 = vcmp.eq.f32.partialorder %v62, 0.0
    %v68 = vand.u32 %v62, 2147483648
    %v69 = vsel %vm67, %v68, %v66
    %v70 = vmul.f32 %v59, 6.2831855
    %v71 = vand.u32 2147483647, %v70
    %vm72 = vcmp.le.f32.partialorder %v71, 0.7853982
    %vm73 = vcmp.lt.s32.totalorder %v70, 0
    %v74 = vand.u32 %v70, 2139095040
    %v75 = vshrl.u32 %v74, 23
    %v76 = vsub.s32 %v75, 127
    %v77 = vand.u32 2147483647, %v70
    %v78 = vand.u32 %v77, 8388607
    %v79 = vor.u32 %v78, 8388608
    %v80 = vsub.s32 0, %v79
    %v81 = vadd.s32 %v76, 1
    %vm82 = vcmp.gt.s32.totalorder %v81, 0
    %v83 = vsel %vm82, %v81, 0
    %v84 = vshrl.u32 %v83, 5
    %v85 = vand.u32 %v83, 31
    %v86 = vsub.s32 32, %v85
    %v87 = vshrl.u32 683565275, %v86
    %v88 = vshll.u32 683565275, %v85
    %v89 = vshrl.u32 2475754826, %v86
    %v90 = vor.u32 %v88, %v89
    %v91 = vshll.u32 2475754826, %v85
    %v92 = vshrl.u32 2131351028, %v86
    %v93 = vor.u32 %v91, %v92
    %v94 = vshll.u32 2131351028, %v85
    %v95 = vshrl.u32 2102212464, %v86
    %v96 = vor.u32 %v94, %v95
    %v97 = vshll.u32 2102212464, %v85
    %v98 = vshrl.u32 920167782, %v86
    %v99 = vor.u32 %v97, %v98
    %v100 = vshll.u32 920167782, %v85
    %v101 = vshrl.u32 1326507024, %v86
    %v102 = vor.u32 %v100, %v101
    %vm103 = vcmp.lt.s32.totalorder %v84, 1
    %vm104 = vcmp.lt.s32.totalorder %v84, 2
    %vm105 = vcmp.lt.s32.totalorder %v84, 3
    %vm106 = vcmp.lt.s32.totalorder %v84, 4
    %v107 = vsel %vm103, %v87, %v90
    %v108 = vsel %vm106, %v96, 2102212464
    %v109 = vsel %vm105, %v93, %v108
    %v110 = vsel %vm104, %v107, %v109
    %v111 = vsel %vm103, %v90, %v93
    %v112 = vsel %vm106, %v99, 920167782
    %v113 = vsel %vm105, %v96, %v112
    %v114 = vsel %vm104, %v111, %v113
    %v115 = vsel %vm103, %v93, %v96
    %v116 = vsel %vm106, %v102, 1326507024
    %v117 = vsel %vm105, %v99, %v116
    %v118 = vsel %vm104, %v115, %v117
    %v119 = vshll.u32 %v79, 8
    %v120 = vmul.u32.u64.compose %v119, %v118
    %v121 = vextract.low.u32 %v120
    %v122 = vextract.high.u32 %v120
    %v123 = vmul.u32.u64.compose %v119, %v114
    %v124 = vextract.low.u32 %v123
    %v125 = vextract.high.u32 %v123
    %v126 = vmul.u32 %v119, %v110
    %v127 = vadd.s32 %v122, %v124
    %vm128 = vc.u32 %v122, %v124
    %v129 = vadd.s32 %v125, 1
    %v130 = vsel %vm128, %v129, %v125
    %v131 = vadd.s32 %v126, %v130
    %v132 = vadd.s32 %v131, 536870912
    %v133 = vshrl.u32 %v132, 30
    %v134 = vshll.u32 %v133, 30
    %v135 = vsub.s32 %v131, %v134
    %vm136 = vcmp.lt.s32.totalorder %v135, 0
    %v137 = vsub.s32 0, %v135
    %v138 = vsel %vm136, %v137, %v135
    %v139 = vclz %v138
    %v140 = vsub.s32 %v139, 2
    %vm141 = vcmp.gt.s32.totalorder 0, %v140
    %v142 = vsel %vm141, 0, %v140
    %v143 = vsub.s32 32, %v142
    %v144 = vshll.u32 %v135, %v142
    %v145 = vshrl.u32 %v127, %v143
    %v146 = vor.u32 %v144, %v145
    %v147 = vsub.s32 4294967266, %v142
    %v148 = vadd.s32 %v147, 127
    %v149 = vshll.u32 %v148, 23
    %v150 = vor.u32 4788187, %v149
    %v151 = vand.u32 2147483647, %v150
    %v153 = vcvt.s32.f32 %v146
    %v154 = vmul.f32 %v153, %v151
    %v155 = vxor.u32 %v154, 2147483648
    %v156 = vsel %vm73, %v155, %v154
    %v157 = vsub.s32 4, %v133
    %v158 = vsel %vm73, %v157, %v133
    %v159 = vsel %vm72, %v70, %v156
    %v160 = vsel %vm72, 0, %v158
    %v161 = vcosq.f32.pop %v159
    %v162 = vsinq.f32.pop %v159
    %vm163 = vweird.f32 %v70
    %v164 = vand.u32 %v160, 3
    %vm165 = vcmp.lt.s32.totalorder %v164, 2
    %vm166 = vcmp.eq.s32.totalorder %v164, 0
    %v167 = vxor.u32 %v162, 2147483648
    %v168 = vsel %vm166, %v161, %v167
    %vm169 = vcmp.eq.s32.totalorder %v164, 2
    %v170 = vxor.u32 %v161, 2147483648
    %v171 = vsel %vm169, %v170, %v162
    %v172 = vsel %vm165, %v168, %v171
    %v173 = vsel %vm163, nan, %v172
    %v174 = vmul.f32 %v69, %v173
    %v175 = vand.u32 2147483647, %v70
    %vm176 = vcmp.le.f32.partialorder %v175, 0.7853982
    %vm177 = vcmp.lt.s32.totalorder %v70, 0
    %v178 = vand.u32 %v70, 2139095040
    %v179 = vshrl.u32 %v178, 23
    %v180 = vsub.s32 %v179, 127
    %v181 = vand.u32 2147483647, %v70
    %v182 = vand.u32 %v181, 8388607
    %v183 = vor.u32 %v182, 8388608
    %v184 = vsub.s32 0, %v183
    %v185 = vadd.s32 %v180, 1
    %vm186 = vcmp.gt.s32.totalorder %v185, 0
    %v187 = vsel %vm186, %v185, 0
    %v188 = vshrl.u32 %v187, 5
    %v189 = vand.u32 %v187, 31
    %v190 = vsub.s32 32, %v189
    %v191 = vshrl.u32 683565275, %v190
    %v192 = vshll.u32 683565275, %v189
    %v193 = vshrl.u32 2475754826, %v190
    %v194 = vor.u32 %v192, %v193
    %v195 = vshll.u32 2475754826, %v189
    %v196 = vshrl.u32 2131351028, %v190
    %v197 = vor.u32 %v195, %v196
    %v198 = vshll.u32 2131351028, %v189
    %v199 = vshrl.u32 2102212464, %v190
    %v200 = vor.u32 %v198, %v199
    %v201 = vshll.u32 2102212464, %v189
    %v202 = vshrl.u32 920167782, %v190
    %v203 = vor.u32 %v201, %v202
    %v204 = vshll.u32 920167782, %v189
    %v205 = vshrl.u32 1326507024, %v190
    %v206 = vor.u32 %v204, %v205
    %vm207 = vcmp.lt.s32.totalorder %v188, 1
    %vm208 = vcmp.lt.s32.totalorder %v188, 2
    %vm209 = vcmp.lt.s32.totalorder %v188, 3
    %vm210 = vcmp.lt.s32.totalorder %v188, 4
    %v211 = vsel %vm207, %v191, %v194
    %v212 = vsel %vm210, %v200, 2102212464
    %v213 = vsel %vm209, %v197, %v212
    %v214 = vsel %vm208, %v211, %v213
    %v215 = vsel %vm207, %v194, %v197
    %v216 = vsel %vm210, %v203, 920167782
    %v217 = vsel %vm209, %v200, %v216
    %v218 = vsel %vm208, %v215, %v217
    %v219 = vsel %vm207, %v197, %v200
    %v220 = vsel %vm210, %v206, 1326507024
    %v221 = vsel %vm209, %v203, %v220
    %v222 = vsel %vm208, %v219, %v221
    %v223 = vshll.u32 %v183, 8
    %v224 = vmul.u32.u64.compose %v223, %v222
    %v225 = vextract.low.u32 %v224
    %v226 = vextract.high.u32 %v224
    %v227 = vmul.u32.u64.compose %v223, %v218
    %v228 = vextract.low.u32 %v227
    %v229 = vextract.high.u32 %v227
    %v230 = vmul.u32 %v223, %v214
    %v231 = vadd.s32 %v226, %v228
    %vm232 = vc.u32 %v226, %v228
    %v233 = vadd.s32 %v229, 1
    %v234 = vsel %vm232, %v233, %v229
    %v235 = vadd.s32 %v230, %v234
    %v236 = vadd.s32 %v235, 536870912
    %v237 = vshrl.u32 %v236, 30
    %v238 = vshll.u32 %v237, 30
    %v239 = vsub.s32 %v235, %v238
    %vm240 = vcmp.lt.s32.totalorder %v239, 0
    %v241 = vsub.s32 0, %v239
    %v242 = vsel %vm240, %v241, %v239
    %v243 = vclz %v242
    %v244 = vsub.s32 %v243, 2
    %vm245 = vcmp.gt.s32.totalorder 0, %v244
    %v246 = vsel %vm245, 0, %v244
    %v247 = vsub.s32 32, %v246
    %v248 = vshll.u32 %v239, %v246
    %v249 = vshrl.u32 %v231, %v247
    %v250 = vor.u32 %v248, %v249
    %v251 = vsub.s32 4294967266, %v246
    %v252 = vadd.s32 %v251, 127
    %v253 = vshll.u32 %v252, 23
    %v254 = vor.u32 4788187, %v253
    %v255 = vand.u32 2147483647, %v254
    %v257 = vcvt.s32.f32 %v250
    %v258 = vmul.f32 %v257, %v255
    %v259 = vxor.u32 %v258, 2147483648
    %v260 = vsel %vm177, %v259, %v258
    %v261 = vsub.s32 4, %v237
    %v262 = vsel %vm177, %v261, %v237
    %v263 = vsel %vm176, %v70, %v260
    %v264 = vsel %vm176, 0, %v262
    %v265 = vcosq.f32.pop %v263
    %v266 = vsinq.f32.pop %v263
    %vm267 = vweird.f32 %v70
    %v268 = vadd.s32 %v264, 3
    %v269 = vand.u32 %v268, 3
    %vm270 = vcmp.lt.s32.totalorder %v269, 2
    %vm271 = vcmp.eq.s32.totalorder %v269, 0
    %v272 = vxor.u32 %v266, 2147483648
    %v273 = vsel %vm271, %v265, %v272
    %vm274 = vcmp.eq.s32.totalorder %v269, 2
    %v275 = vxor.u32 %v265, 2147483648
    %v276 = vsel %vm274, %v275, %v266
    %v277 = vsel %vm270, %v273, %v276
    %v278 = vsel %vm267, nan, %v277
    %v279 = vmul.f32 %v69, %v278
    %v280 = vld [vmem:[#allocation2] sm:$0xff]
    %v281 = vld [vmem:[#allocation2 + $0x8] sm:$0xff]
    %v282 = vmul.f32 %v280, 0.7
    %v283 = vmul.f32 %v174, 0.3
    %v284 = vadd.f32 %v282, %v283
    %285 = vst [vmem:[#allocation5] sm:$0xff] %v284
    %v286 = vmul.f32 %v281, 0.7
    %v287 = vmul.f32 %v279, 0.3
    %v288 = vadd.f32 %v286, %v287
    %289 = vst [vmem:[#allocation5 + $0x8] sm:$0xff] %v288
    // Predicated region
    $region10: #{tpu_custom_call.1} parent=1 // pred_check
      _
    $region11: #{tpu_custom_call.1} parent=1 // pred_check_branch
      %291 = sbr.rel (0) target = $region13
    $region12: #{tpu_custom_call.1} parent=1 // pred_region
      %s293 = ssub.s32 256, 256
      %294 = vsyncadd [#allocation4], %s293
      %s295 = sshll.u32 [#allocation5], 4
      %s296 = int_to_ptr.vmem [resolvable:$true] %s295
      %301 = dma.vmem_to_hbm [thread:$0]  %s296, 256, %s1, [#allocation4], 128, 128, 8
    $region13: #{tpu_custom_call.1} parent=1 // pred_fallthru
      _
    // Predicated region
    $region14: #{tpu_custom_call.1} parent=1 // pred_check
      _
    $region15: #{tpu_custom_call.1} parent=1 // pred_check_branch
      %303 = sbr.rel (0) target = $region17
    $region16: #{tpu_custom_call.1} parent=1 // pred_region
      %304 = dma.done [#allocation4], 256
    $region17: #{tpu_custom_call.1} parent=1 // pred_fallthru
      _
    %305 = vsyncpa [#allocation3], 1
    %306 = vsyncpa [#allocation4], 1

</llo_original>
